<compile_context>
chip_gen: v6e
topology: v6e:2x2x1
jax: 0.10.0
libtpu: 0.0.40
codegen_flags: <defaults>
</compile_context>

<pallas_src>
import functools

import jax
import jax.numpy as jnp
from jax.experimental import pallas as pl
from jax.experimental.pallas import tpu as pltpu


def _silu(z):
    # Exact SiLU: z * sigmoid(z).  exp -> EUP, divide -> VPU; both are pure
    # slack under the x DMA, so exactness is free.
    return z / (1.0 + jnp.exp(-z))


def _readout_kernel(x_ref, w1t_ref, wmt_ref, bm_ref, w2t_ref, b2_ref, o_ref,
                    *, n_total, tile):
    i = pl.program_id(0)

    # x tile in native node-major layout: (tile, C_in).
    x = x_ref[...].astype(jnp.float32)

    # Zero-mask the out-of-bounds rows of the (possibly partial) last block so
    # garbage VMEM data never reaches exp() (keeps everything finite; the
    # corresponding output columns are dropped / sliced away anyway).
    rem = n_total - i * tile
    node_idx = jax.lax.broadcasted_iota(jnp.int32, (tile, 1), 0)
    x = jnp.where(node_idx < rem, x, 0.0)

    # linear_1 + gate: contract C_in of both operands ("NT" matmul).
    # (H, C_in) x (tile, C_in) -> (H, tile), channels-major (nodes on lanes).
    h1 = jax.lax.dot_general(
        w1t_ref[...], x,
        dimension_numbers=(((1,), (1,)), ((), ())),
        preferred_element_type=jnp.float32)
    h1 = _silu(h1)

    # linear_mid (+bias) + gate: (H, H) x (H, tile) -> (H, tile).
    h2 = jnp.dot(wmt_ref[...], h1, preferred_element_type=jnp.float32)
    h2 = _silu(h2 + bm_ref[...])                 # (H, 1) broadcast over lanes

    # linear_2 (+bias): (O, H) x (H, tile) -> (O, tile), lane-dense output.
    out = jnp.dot(w2t_ref[...], h2, preferred_element_type=jnp.float32)
    out = out + b2_ref[...]                      # (O, 1) broadcast over lanes

    o_ref[...] = out.astype(o_ref.dtype)


def nonlinear_bias_readout(x, w1, wm, bm, w2, b2, *,
                           heads=None, num_heads=1, tile_n=8192):
    """Fused MLP readout.

    x  : (N, C_in)       node features (any N; ragged tail handled in-kernel)
    w1 : (C_in, H)       linear_1 weight (fan-in norm folded in)
    wm : (H, H), bm:(H,) linear_mid weight / bias
    w2 : (H, O), b2:(O,) linear_2 weight / bias
    returns (N, O)
    """
    if num_heads > 1 and heads is not None:
        # TODO(synk): multi-head mask_head path not implemented.
        raise NotImplementedError("mask_head (num_heads > 1) not supported")

    n, c_in = x.shape
    h = w1.shape[1]
    o = w2.shape[1]

    # Lane-aligned node tile; never larger than needed for a single step.
    tile = max(128, min((tile_n // 128) * 128, pl.cdiv(n, 128) * 128))
    grid = (pl.cdiv(n, tile),)

    # Small resident operands (fetched once, constant index maps).
    w1t = w1.T                                   # (H, C_in)
    wmt = wm.T                                   # (H, H)
    w2t = w2.T                                   # (O, H)
    bm_col = bm.reshape(h, 1)
    b2_col = b2.reshape(o, 1)

    flops = 2 * n * (c_in * h + h * h + h * o)
    transcendentals = 2 * n * h                  # two SiLU layers
    bytes_accessed = 4 * (n * (c_in + o)
                          + c_in * h + h * h + h + h * o + o)

    kernel = functools.partial(_readout_kernel, n_total=n, tile=tile)

    out_t = pl.pallas_call(
        kernel,
        out_shape=jax.ShapeDtypeStruct((o, n), x.dtype),
        grid=grid,
        in_specs=[
            pl.BlockSpec((tile, c_in), lambda i: (i, 0)),   # x tile (native layout)
            pl.BlockSpec((h, c_in), lambda i: (0, 0)),      # W1^T   (resident)
            pl.BlockSpec((h, h), lambda i: (0, 0)),         # Wmid^T (resident)
            pl.BlockSpec((h, 1), lambda i: (0, 0)),         # b_mid column
            pl.BlockSpec((o, h), lambda i: (0, 0)),         # W2^T   (resident)
            pl.BlockSpec((o, 1), lambda i: (0, 0)),         # b2 column
        ],
        out_specs=pl.BlockSpec((o, tile), lambda i: (0, i)),  # lane-dense output
        compiler_params=pltpu.CompilerParams(
            dimension_semantics=("parallel",)),
        cost_estimate=pl.CostEstimate(
            flops=flops,
            transcendentals=transcendentals,
            bytes_accessed=bytes_accessed),
    )(x, w1t, wmt, bm_col, w2t, b2_col)

    return out_t.T                               # (N, O); O*N floats -> trivial


def _reference(x, w1, wm, bm, w2, b2):
    h1 = jax.nn.silu(x @ w1)
    h2 = jax.nn.silu(h1 @ wm + bm)
    return h2 @ w2 + b2


if __name__ == "__main__":
    # Shapes implied by the module defaults:
    #   irreps_in  = "32x0e" -> C_in = 32
    #   MLP_irreps = "16x0e" -> H    = 16
    #   irrep_out  = "0e"    -> O    = 1
    #   num_heads  = 1, heads = None
    # Node count deliberately not 128-aligned (exercises the partial-block
    # tail + in-kernel masking path).
    num_nodes, c_in, hidden, out_dim = 333, 32, 16, 1

    key = jax.random.PRNGKey(0)
    kx, k1, km, kbm, k2, kb2 = jax.random.split(key, 6)

    x = jax.random.normal(kx, (num_nodes, c_in), dtype=jnp.float32)

    # e3nn o3.Linear: weights ~ N(0,1), forward scales by 1/sqrt(fan_in);
    # fold the normalization into the stored weights.
    w1 = jax.random.normal(k1, (c_in, hidden), jnp.float32) / jnp.sqrt(float(c_in))
    wm = jax.random.normal(km, (hidden, hidden), jnp.float32) / jnp.sqrt(float(hidden))
    bm = jax.random.normal(kbm, (hidden,), jnp.float32)
    w2 = jax.random.normal(k2, (hidden, out_dim), jnp.float32) / jnp.sqrt(float(hidden))
    b2 = jax.random.normal(kb2, (out_dim,), jnp.float32)

    out = nonlinear_bias_readout(x, w1, wm, bm, w2, b2)
    out = jax.block_until_ready(out)

    ref = _reference(x, w1, wm, bm.reshape(1, -1), w2, b2.reshape(1, -1))
    assert out.shape == (num_nodes, out_dim)
    assert bool(jnp.all(jnp.isfinite(out)))
    max_err = float(jnp.max(jnp.abs(out - ref)))
    # Exact sigmoid now -> tight tolerance (only f32 matmul rounding remains).
    assert jnp.allclose(out, ref, atol=1e-4, rtol=1e-4), max_err

    print("KERNEL_OK")
</pallas_src>

<mosaic_0001>
module attributes {stable_mosaic.version = 11 : i64} {
  func.func @_readout_kernel(%arg0: i32, %arg1: memref<384x32xf32, #tpu.memory_space<vmem>>, %arg2: memref<16x32xf32, #tpu.memory_space<vmem>>, %arg3: memref<16x16xf32, #tpu.memory_space<vmem>>, %arg4: memref<16x1xf32, #tpu.memory_space<vmem>>, %arg5: memref<1x16xf32, #tpu.memory_space<vmem>>, %arg6: memref<1x1xf32, #tpu.memory_space<vmem>>, %arg7: memref<1x384xf32, #tpu.memory_space<vmem>>) attributes {dimension_semantics = [#tpu.dimension_semantics<parallel>], iteration_bounds = array<i64: 1>, scalar_prefetch = 0 : i64, scratch_operands = 0 : i64, tpu.core_type = #tpu.core_type<tc>, window_params = [{transform_indices = @transform_0, window_bounds = array<i64: 384, 32>}, {pipeline_mode = #tpu.pipeline_mode<synchronous>, transform_indices = @transform_1, window_bounds = array<i64: 16, 32>}, {pipeline_mode = #tpu.pipeline_mode<synchronous>, transform_indices = @transform_2, window_bounds = array<i64: 16, 16>}, {pipeline_mode = #tpu.pipeline_mode<synchronous>, transform_indices = @transform_3, window_bounds = array<i64: 16, 1>}, {pipeline_mode = #tpu.pipeline_mode<synchronous>, transform_indices = @transform_4, window_bounds = array<i64: 1, 16>}, {pipeline_mode = #tpu.pipeline_mode<synchronous>, transform_indices = @transform_5, window_bounds = array<i64: 1, 1>}, {transform_indices = @transform_6, window_bounds = array<i64: 1, 384>}]} {
    %c0 = arith.constant 0 : index
    %c0_0 = arith.constant 0 : index
    %0 = vector.load %arg1[%c0, %c0_0] : memref<384x32xf32, #tpu.memory_space<vmem>>, vector<384x32xf32>
    %c384_i32 = arith.constant 384 : i32
    %1 = arith.muli %arg0, %c384_i32 : i32
    %c333_i32 = arith.constant 333 : i32
    %2 = arith.subi %c333_i32, %1 : i32
    %3 = tpu.iota {dimensions = array<i32: 0>} : vector<384x1xi32>
    %4 = vector.broadcast %2 : i32 to vector<384x1xi32>
    %5 = arith.cmpi slt, %3, %4 : vector<384x1xi32>
    %cst = arith.constant 0.000000e+00 : f32
    %6 = vector.shape_cast %5 : vector<384x1xi1> to vector<384x1xi1>
    %7 = vector.broadcast %6 : vector<384x1xi1> to vector<384x32xi1>
    %8 = vector.broadcast %cst : f32 to vector<384x32xf32>
    %9 = arith.select %7, %0, %8 : vector<384x32xi1>, vector<384x32xf32>
    %c0_1 = arith.constant 0 : index
    %c0_2 = arith.constant 0 : index
    %10 = vector.load %arg2[%c0_1, %c0_2] : memref<16x32xf32, #tpu.memory_space<vmem>>, vector<16x32xf32>
    %cst_3 = arith.constant dense<0.000000e+00> : vector<16x384xf32>
    %11 = tpu.matmul %10, %9, %cst_3 {dimension_numbers = #tpu.dot_dimension_numbers<[1], [1], [0], [0], [0, 0, 1, 0], [], []>} : vector<16x32xf32>, vector<384x32xf32>, vector<16x384xf32> -> vector<16x384xf32>
    %cst_4 = arith.constant 0.000000e+00 : f32
    %12 = vector.broadcast %cst_4 : f32 to vector<16x384xf32>
    %13 = arith.subf %12, %11 : vector<16x384xf32>
    %14 = math.exp %13 : vector<16x384xf32>
    %cst_5 = arith.constant 1.000000e+00 : f32
    %15 = vector.broadcast %cst_5 : f32 to vector<16x384xf32>
    %16 = arith.addf %15, %14 : vector<16x384xf32>
    %17 = arith.divf %11, %16 : vector<16x384xf32>
    %c0_6 = arith.constant 0 : index
    %c0_7 = arith.constant 0 : index
    %18 = vector.load %arg3[%c0_6, %c0_7] : memref<16x16xf32, #tpu.memory_space<vmem>>, vector<16x16xf32>
    %cst_8 = arith.constant dense<0.000000e+00> : vector<16x384xf32>
    %19 = tpu.matmul %18, %17, %cst_8 {dimension_numbers = #tpu.dot_dimension_numbers<[1], [0], [0], [1], [0, 0, 1, 1], [], []>} : vector<16x16xf32>, vector<16x384xf32>, vector<16x384xf32> -> vector<16x384xf32>
    %c0_9 = arith.constant 0 : index
    %c0_10 = arith.constant 0 : index
    %20 = vector.load %arg4[%c0_9, %c0_10] : memref<16x1xf32, #tpu.memory_space<vmem>>, vector<16x1xf32>
    %21 = vector.broadcast %20 : vector<16x1xf32> to vector<16x384xf32>
    %22 = arith.addf %19, %21 : vector<16x384xf32>
    %cst_11 = arith.constant 0.000000e+00 : f32
    %23 = vector.broadcast %cst_11 : f32 to vector<16x384xf32>
    %24 = arith.subf %23, %22 : vector<16x384xf32>
    %25 = math.exp %24 : vector<16x384xf32>
    %cst_12 = arith.constant 1.000000e+00 : f32
    %26 = vector.broadcast %cst_12 : f32 to vector<16x384xf32>
    %27 = arith.addf %26, %25 : vector<16x384xf32>
    %28 = arith.divf %22, %27 : vector<16x384xf32>
    %c0_13 = arith.constant 0 : index
    %c0_14 = arith.constant 0 : index
    %29 = vector.load %arg5[%c0_13, %c0_14] : memref<1x16xf32, #tpu.memory_space<vmem>>, vector<1x16xf32>
    %cst_15 = arith.constant dense<0.000000e+00> : vector<1x384xf32>
    %30 = tpu.matmul %29, %28, %cst_15 {dimension_numbers = #tpu.dot_dimension_numbers<[1], [0], [0], [1], [0, 0, 1, 1], [], []>} : vector<1x16xf32>, vector<16x384xf32>, vector<1x384xf32> -> vector<1x384xf32>
    %c0_16 = arith.constant 0 : index
    %c0_17 = arith.constant 0 : index
    %31 = vector.load %arg6[%c0_16, %c0_17] : memref<1x1xf32, #tpu.memory_space<vmem>>, vector<1x1xf32>
    %32 = vector.broadcast %31 : vector<1x1xf32> to vector<1x384xf32>
    %33 = arith.addf %30, %32 : vector<1x384xf32>
    %c0_18 = arith.constant 0 : index
    %c0_19 = arith.constant 0 : index
    %34 = vector.load %arg7[%c0_18, %c0_19] : memref<1x384xf32, #tpu.memory_space<vmem>>, vector<1x384xf32>
    tpu.vector_store %arg7[%c0_18, %c0_19], %33 {strides = array<i32>} : memref<1x384xf32, #tpu.memory_space<vmem>>, vector<1x384xf32>,
    return
  }
  func.func @transform_0(%arg0: i32) -> (i32, i32) {
    %c0_i32 = arith.constant 0 : i32
    %c0_i32_0 = arith.constant 0 : i32
    return %arg0, %c0_i32 : i32, i32
  }
  func.func @transform_1(%arg0: i32) -> (i32, i32) {
    %c0_i32 = arith.constant 0 : i32
    %c0_i32_0 = arith.constant 0 : i32
    %c0_i32_1 = arith.constant 0 : i32
    return %c0_i32, %c0_i32_0 : i32, i32
  }
  func.func @transform_2(%arg0: i32) -> (i32, i32) {
    %c0_i32 = arith.constant 0 : i32
    %c0_i32_0 = arith.constant 0 : i32
    %c0_i32_1 = arith.constant 0 : i32
    return %c0_i32, %c0_i32_0 : i32, i32
  }
  func.func @transform_3(%arg0: i32) -> (i32, i32) {
    %c0_i32 = arith.constant 0 : i32
    %c0_i32_0 = arith.constant 0 : i32
    %c0_i32_1 = arith.constant 0 : i32
    return %c0_i32, %c0_i32_0 : i32, i32
  }
  func.func @transform_4(%arg0: i32) -> (i32, i32) {
    %c0_i32 = arith.constant 0 : i32
    %c0_i32_0 = arith.constant 0 : i32
    %c0_i32_1 = arith.constant 0 : i32
    return %c0_i32, %c0_i32_0 : i32, i32
  }
  func.func @transform_5(%arg0: i32) -> (i32, i32) {
    %c0_i32 = arith.constant 0 : i32
    %c0_i32_0 = arith.constant 0 : i32
    %c0_i32_1 = arith.constant 0 : i32
    return %c0_i32, %c0_i32_0 : i32, i32
  }
  func.func @transform_6(%arg0: i32) -> (i32, i32) {
    %c0_i32 = arith.constant 0 : i32
    %c0_i32_0 = arith.constant 0 : i32
    return %c0_i32, %arg0 : i32, i32
  }
}

</mosaic_0001>

<llo_original>
// kernel: tpu_custom_call.1
$region0: #{tpu_custom_call.1}
  #allocation0 [shape = 'u32[]', space=smem, size = 0x4, offset = 0x4, fixed_abs, tag = 'smem constant byte address 0x4 - core index']
  #allocation1 [shape = 'u32[144,128]{1,0:T(1,128)}', space=vmem, size = 0x12000, scoped, tag = 'internal scratch']
  #allocation2 [shape = 'f32[1,1]{1,0:T(1,128)S(1)}', space=vmem, size = 0x200, scoped, tag = 'scoped memory for tpu_custom_call.1']
  %s0 = inlined_call_operand.vmem [shape: f32[333,32], index: 0, kind: input, shape index: {}]
  %s1 = inlined_call_operand.vmem [shape: f32[16,32], index: 1, kind: input, shape index: {}]
  %s2 = inlined_call_operand.vmem [shape: f32[16,16], index: 2, kind: input, shape index: {}]
  %s3 = inlined_call_operand.vmem [shape: f32[16,1], index: 3, kind: input, shape index: {}]
  %s4 = inlined_call_operand.vmem [shape: f32[1,16], index: 4, kind: input, shape index: {}]
  %s5 = inlined_call_operand.<no memory space> [shape: f32[1,1], index: 5, kind: input, shape index: {}]
  %s6 = inlined_call_operand.hbm [shape: f32[1,333], index: 6, kind: output, shape index: {}]
  %s7 = sld [smem:[#allocation0]]
  $region34: #{tpu_custom_call.1} parent=0
    _
  %s9 = ssub.s32 1, %s7
  %s10 = scalar_select 0, %s9, %s7
  %v11 = vstv %s5
  %12 = vst [vmem:[#allocation2] sm:$0x1] %v11
  $region1: #{tpu_custom_call.1} parent=0
    #allocation3 [shape = 'u8[1536]{0}', space=vmem, size = 0x800, scoped, tag = 'output window, operand 0, single buffered']
    #allocation4 [shape = 's32[1]{0}', space=sflag, size = 0x4, scoped, tag = 'scoped memory for tpu_custom_call.1']
    %13 = vsyncpa [#allocation4], 0
    // Predicated region
    $region2: #{tpu_custom_call.1} parent=1 // pred_check
      _
    $region3: #{tpu_custom_call.1} parent=1 // pred_check_branch
      %15 = sbr.rel (0) target = $region5
    $region4: #{tpu_custom_call.1} parent=1 // pred_region
      _
    $region5: #{tpu_custom_call.1} parent=1 // pred_fallthru
      _
    // Predicated region
    $region6: #{tpu_custom_call.1} parent=1 // pred_check
      _
    $region7: #{tpu_custom_call.1} parent=1 // pred_check_branch
      %17 = sbr.rel (0) target = $region9
    $region8: #{tpu_custom_call.1} parent=1 // pred_region
      _
    $region9: #{tpu_custom_call.1} parent=1 // pred_fallthru
      _
    // Predicated region
    $region10: #{tpu_custom_call.1} parent=1 // pred_check
      _
    $region11: #{tpu_custom_call.1} parent=1 // pred_check_branch
      %19 = sbr.rel (0) target = $region13
    $region12: #{tpu_custom_call.1} parent=1 // pred_region
      _
    $region13: #{tpu_custom_call.1} parent=1 // pred_fallthru
      _
    // Predicated region
    $region14: #{tpu_custom_call.1} parent=1 // pred_check
      _
    $region15: #{tpu_custom_call.1} parent=1 // pred_check_branch
      %21 = sbr.rel (0) target = $region17
    $region16: #{tpu_custom_call.1} parent=1 // pred_region
      _
    $region17: #{tpu_custom_call.1} parent=1 // pred_fallthru
      _
    // Predicated region
    $region18: #{tpu_custom_call.1} parent=1 // pred_check
      _
    $region19: #{tpu_custom_call.1} parent=1 // pred_check_branch
      %23 = sbr.rel (0) target = $region21
    $region20: #{tpu_custom_call.1} parent=1 // pred_region
      _
    $region21: #{tpu_custom_call.1} parent=1 // pred_fallthru
      _
    // Predicated region
    $region22: #{tpu_custom_call.1} parent=1 // pred_check
      _
    $region23: #{tpu_custom_call.1} parent=1 // pred_check_branch
      %25 = sbr.rel (0) target = $region25
    $region24: #{tpu_custom_call.1} parent=1 // pred_region
      _
    $region25: #{tpu_custom_call.1} parent=1 // pred_fallthru
      _
    %v26 = vld [vmem:[%s0] sm:$0xff]
    %v27 = vld [vmem:[%s0 + $0x8] sm:$0xff]
    %v28 = vld [vmem:[%s0 + $0x10] sm:$0xff]
    %v29 = vld [vmem:[%s0 + $0x18] sm:$0xff]
    %v30 = vld [vmem:[%s0 + $0x20] sm:$0xff]
    %v31 = vld [vmem:[%s0 + $0x28] sm:$0xff]
    %v32 = vld [vmem:[%s0 + $0x30] sm:$0xff]
    %v33 = vld [vmem:[%s0 + $0x38] sm:$0xff]
    %v34 = vld [vmem:[%s0 + $0x40] sm:$0xff]
    %v35 = vld [vmem:[%s0 + $0x48] sm:$0xff]
    %v36 = vld [vmem:[%s0 + $0x50] sm:$0xff]
    %v37 = vld [vmem:[%s0 + $0x58] sm:$0xff]
    %v38 = vld [vmem:[%s0 + $0x60] sm:$0xff]
    %v39 = vld [vmem:[%s0 + $0x68] sm:$0xff]
    %v40 = vld [vmem:[%s0 + $0x70] sm:$0xff]
    %v41 = vld [vmem:[%s0 + $0x78] sm:$0xff]
    %v42 = vld [vmem:[%s0 + $0x80] sm:$0xff]
    %v43 = vld [vmem:[%s0 + $0x88] sm:$0xff]
    %v44 = vld [vmem:[%s0 + $0x90] sm:$0xff]
    %v45 = vld [vmem:[%s0 + $0x98] sm:$0xff]
    %v46 = vld [vmem:[%s0 + $0xa0] sm:$0xff]
    %v47 = vld [vmem:[%s0 + $0xa8] sm:$0xff]
    %v48 = vld [vmem:[%s0 + $0xb0] sm:$0xff]
    %v49 = vld [vmem:[%s0 + $0xb8] sm:$0xff]
    %v50 = vld [vmem:[%s0 + $0xc0] sm:$0xff]
    %v51 = vld [vmem:[%s0 + $0xc8] sm:$0xff]
    %v52 = vld [vmem:[%s0 + $0xd0] sm:$0xff]
    %v53 = vld [vmem:[%s0 + $0xd8] sm:$0xff]
    %v54 = vld [vmem:[%s0 + $0xe0] sm:$0xff]
    %v55 = vld [vmem:[%s0 + $0xe8] sm:$0xff]
    %v56 = vld [vmem:[%s0 + $0xf0] sm:$0xff]
    %v57 = vld [vmem:[%s0 + $0xf8] sm:$0xff]
    %v58 = vld [vmem:[%s0 + $0x100] sm:$0xff]
    %v59 = vld [vmem:[%s0 + $0x108] sm:$0xff]
    %v60 = vld [vmem:[%s0 + $0x110] sm:$0xff]
    %v61 = vld [vmem:[%s0 + $0x118] sm:$0xff]
    %v62 = vld [vmem:[%s0 + $0x120] sm:$0xff]
    %v63 = vld [vmem:[%s0 + $0x128] sm:$0xff]
    %v64 = vld [vmem:[%s0 + $0x130] sm:$0xff]
    %v65 = vld [vmem:[%s0 + $0x138] sm:$0xff]
    %v66 = vld [vmem:[%s0 + $0x140] sm:$0xff]
    %v67 = vld [vmem:[%s0 + $0x148] sm:$0xff]
    %v68 = vld [vmem:[%s0 + $0x150] sm:$0xff]
    %v69 = vld [vmem:[%s0 + $0x158] sm:$0xff]
    %v70 = vld [vmem:[%s0 + $0x160] sm:$0xff]
    %v71 = vld [vmem:[%s0 + $0x168] sm:$0xff]
    %v72 = vld [vmem:[%s0 + $0x170] sm:$0xff]
    %v73 = vld [vmem:[%s0 + $0x178] sm:$0xff]
    %s74 = smul.u32 0, 384
    %s75 = ssub.s32 333, %s74
    %v76 = vlaneseq
    %v77 = vshrl.u32 %v76, 7
    %v78 = vadd.s32 %v77, 8
    %v79 = vadd.s32 %v77, 16
    %v80 = vadd.s32 %v77, 24
    %v81 = vadd.s32 %v77, 32
    %v82 = vadd.s32 %v77, 40
    %v83 = vadd.s32 %v77, 48
    %v84 = vadd.s32 %v77, 56
    %v85 = vadd.s32 %v77, 64
    %v86 = vadd.s32 %v77, 72
    %v87 = vadd.s32 %v77, 80
    %v88 = vadd.s32 %v77, 88
    %v89 = vadd.s32 %v77, 96
    %v90 = vadd.s32 %v77, 104
    %v91 = vadd.s32 %v77, 112
    %v92 = vadd.s32 %v77, 120
    %v93 = vadd.s32 %v77, 128
    %v94 = vadd.s32 %v77, 136
    %v95 = vadd.s32 %v77, 144
    %v96 = vadd.s32 %v77, 152
    %v97 = vadd.s32 %v77, 160
    %v98 = vadd.s32 %v77, 168
    %v99 = vadd.s32 %v77, 176
    %v100 = vadd.s32 %v77, 184
    %v101 = vadd.s32 %v77, 192
    %v102 = vadd.s32 %v77, 200
    %v103 = vadd.s32 %v77, 208
    %v104 = vadd.s32 %v77, 216
    %v105 = vadd.s32 %v77, 224
    %v106 = vadd.s32 %v77, 232
    %v107 = vadd.s32 %v77, 240
    %v108 = vadd.s32 %v77, 248
    %v109 = vadd.s32 %v77, 256
    %v110 = vadd.s32 %v77, 264
    %v111 = vadd.s32 %v77, 272
    %v112 = vadd.s32 %v77, 280
    %v113 = vadd.s32 %v77, 288
    %v114 = vadd.s32 %v77, 296
    %v115 = vadd.s32 %v77, 304
    %v116 = vadd.s32 %v77, 312
    %v117 = vadd.s32 %v77, 320
    %v118 = vadd.s32 %v77, 328
    %v119 = vadd.s32 %v77, 336
    %v120 = vadd.s32 %v77, 344
    %v121 = vadd.s32 %v77, 352
    %v122 = vadd.s32 %v77, 360
    %v123 = vadd.s32 %v77, 368
    %v124 = vadd.s32 %v77, 376
    %v125 = vstv %s75
    %vm126 = vcmp.lt.s32.totalorder %v77, %v125
    %vm127 = vcmp.lt.s32.totalorder %v78, %v125
    %vm128 = vcmp.lt.s32.totalorder %v79, %v125
    %vm129 = vcmp.lt.s32.totalorder %v80, %v125
    %vm130 = vcmp.lt.s32.totalorder %v81, %v125
    %vm131 = vcmp.lt.s32.totalorder %v82, %v125
    %vm132 = vcmp.lt.s32.totalorder %v83, %v125
    %vm133 = vcmp.lt.s32.totalorder %v84, %v125
    %vm134 = vcmp.lt.s32.totalorder %v85, %v125
    %vm135 = vcmp.lt.s32.totalorder %v86, %v125
    %vm136 = vcmp.lt.s32.totalorder %v87, %v125
    %vm137 = vcmp.lt.s32.totalorder %v88, %v125
    %vm138 = vcmp.lt.s32.totalorder %v89, %v125
    %vm139 = vcmp.lt.s32.totalorder %v90, %v125
    %vm140 = vcmp.lt.s32.totalorder %v91, %v125
    %vm141 = vcmp.lt.s32.totalorder %v92, %v125
    %vm142 = vcmp.lt.s32.totalorder %v93, %v125
    %vm143 = vcmp.lt.s32.totalorder %v94, %v125
    %vm144 = vcmp.lt.s32.totalorder %v95, %v125
    %vm145 = vcmp.lt.s32.totalorder %v96, %v125
    %vm146 = vcmp.lt.s32.totalorder %v97, %v125
    %vm147 = vcmp.lt.s32.totalorder %v98, %v125
    %vm148 = vcmp.lt.s32.totalorder %v99, %v125
    %vm149 = vcmp.lt.s32.totalorder %v100, %v125
    %vm150 = vcmp.lt.s32.totalorder %v101, %v125
    %vm151 = vcmp.lt.s32.totalorder %v102, %v125
    %vm152 = vcmp.lt.s32.totalorder %v103, %v125
    %vm153 = vcmp.lt.s32.totalorder %v104, %v125
    %vm154 = vcmp.lt.s32.totalorder %v105, %v125
    %vm155 = vcmp.lt.s32.totalorder %v106, %v125
    %vm156 = vcmp.lt.s32.totalorder %v107, %v125
    %vm157 = vcmp.lt.s32.totalorder %v108, %v125
    %vm158 = vcmp.lt.s32.totalorder %v109, %v125
    %vm159 = vcmp.lt.s32.totalorder %v110, %v125
    %vm160 = vcmp.lt.s32.totalorder %v111, %v125
    %vm161 = vcmp.lt.s32.totalorder %v112, %v125
    %vm162 = vcmp.lt.s32.totalorder %v113, %v125
    %vm163 = vcmp.lt.s32.totalorder %v114, %v125
    %vm164 = vcmp.lt.s32.totalorder %v115, %v125
    %vm165 = vcmp.lt.s32.totalorder %v116, %v125
    %vm166 = vcmp.lt.s32.totalorder %v117, %v125
    %vm167 = vcmp.lt.s32.totalorder %v118, %v125
    %vm168 = vcmp.lt.s32.totalorder %v119, %v125
    %vm169 = vcmp.lt.s32.totalorder %v120, %v125
    %vm170 = vcmp.lt.s32.totalorder %v121, %v125
    %vm171 = vcmp.lt.s32.totalorder %v122, %v125
    %vm172 = vcmp.lt.s32.totalorder %v123, %v125
    %vm173 = vcmp.lt.s32.totalorder %v124, %v125
    %v174 = vsel %vm126, 1, 0
    %v175 = vsel %vm127, 1, 0
    %v176 = vsel %vm128, 1, 0
    %v177 = vsel %vm129, 1, 0
    %v178 = vsel %vm130, 1, 0
    %v179 = vsel %vm131, 1, 0
    %v180 = vsel %vm132, 1, 0
    %v181 = vsel %vm133, 1, 0
    %v182 = vsel %vm134, 1, 0
    %v183 = vsel %vm135, 1, 0
    %v184 = vsel %vm136, 1, 0
    %v185 = vsel %vm137, 1, 0
    %v186 = vsel %vm138, 1, 0
    %v187 = vsel %vm139, 1, 0
    %v188 = vsel %vm140, 1, 0
    %v189 = vsel %vm141, 1, 0
    %v190 = vsel %vm142, 1, 0
    %v191 = vsel %vm143, 1, 0
    %v192 = vsel %vm144, 1, 0
    %v193 = vsel %vm145, 1, 0
    %v194 = vsel %vm146, 1, 0
    %v195 = vsel %vm147, 1, 0
    %v196 = vsel %vm148, 1, 0
    %v197 = vsel %vm149, 1, 0
    %v198 = vsel %vm150, 1, 0
    %v199 = vsel %vm151, 1, 0
    %v200 = vsel %vm152, 1, 0
    %v201 = vsel %vm153, 1, 0
    %v202 = vsel %vm154, 1, 0
    %v203 = vsel %vm155, 1, 0
    %v204 = vsel %vm156, 1, 0
    %v205 = vsel %vm157, 1, 0
    %v206 = vsel %vm158, 1, 0
    %v207 = vsel %vm159, 1, 0
    %v208 = vsel %vm160, 1, 0
    %v209 = vsel %vm161, 1, 0
    %v210 = vsel %vm162, 1, 0
    %v211 = vsel %vm163, 1, 0
    %v212 = vsel %vm164, 1, 0
    %v213 = vsel %vm165, 1, 0
    %v214 = vsel %vm166, 1, 0
    %v215 = vsel %vm167, 1, 0
    %v216 = vsel %vm168, 1, 0
    %v217 = vsel %vm169, 1, 0
    %v218 = vsel %vm170, 1, 0
    %v219 = vsel %vm171, 1, 0
    %v220 = vsel %vm172, 1, 0
    %v221 = vsel %vm173, 1, 0
    %vm222 = vcmp.eq.s32.totalorder %v174, 1
    %vm223 = vcmp.eq.s32.totalorder %v175, 1
    %vm224 = vcmp.eq.s32.totalorder %v176, 1
    %vm225 = vcmp.eq.s32.totalorder %v177, 1
    %vm226 = vcmp.eq.s32.totalorder %v178, 1
    %vm227 = vcmp.eq.s32.totalorder %v179, 1
    %vm228 = vcmp.eq.s32.totalorder %v180, 1
    %vm229 = vcmp.eq.s32.totalorder %v181, 1
    %vm230 = vcmp.eq.s32.totalorder %v182, 1
    %vm231 = vcmp.eq.s32.totalorder %v183, 1
    %vm232 = vcmp.eq.s32.totalorder %v184, 1
    %vm233 = vcmp.eq.s32.totalorder %v185, 1
    %vm234 = vcmp.eq.s32.totalorder %v186, 1
    %vm235 = vcmp.eq.s32.totalorder %v187, 1
    %vm236 = vcmp.eq.s32.totalorder %v188, 1
    %vm237 = vcmp.eq.s32.totalorder %v189, 1
    %vm238 = vcmp.eq.s32.totalorder %v190, 1
    %vm239 = vcmp.eq.s32.totalorder %v191, 1
    %vm240 = vcmp.eq.s32.totalorder %v192, 1
    %vm241 = vcmp.eq.s32.totalorder %v193, 1
    %vm242 = vcmp.eq.s32.totalorder %v194, 1
    %vm243 = vcmp.eq.s32.totalorder %v195, 1
    %vm244 = vcmp.eq.s32.totalorder %v196, 1
    %vm245 = vcmp.eq.s32.totalorder %v197, 1
    %vm246 = vcmp.eq.s32.totalorder %v198, 1
    %vm247 = vcmp.eq.s32.totalorder %v199, 1
    %vm248 = vcmp.eq.s32.totalorder %v200, 1
    %vm249 = vcmp.eq.s32.totalorder %v201, 1
    %vm250 = vcmp.eq.s32.totalorder %v202, 1
    %vm251 = vcmp.eq.s32.totalorder %v203, 1
    %vm252 = vcmp.eq.s32.totalorder %v204, 1
    %vm253 = vcmp.eq.s32.totalorder %v205, 1
    %vm254 = vcmp.eq.s32.totalorder %v206, 1
    %vm255 = vcmp.eq.s32.totalorder %v207, 1
    %vm256 = vcmp.eq.s32.totalorder %v208, 1
    %vm257 = vcmp.eq.s32.totalorder %v209, 1
    %vm258 = vcmp.eq.s32.totalorder %v210, 1
    %vm259 = vcmp.eq.s32.totalorder %v211, 1
    %vm260 = vcmp.eq.s32.totalorder %v212, 1
    %vm261 = vcmp.eq.s32.totalorder %v213, 1
    %vm262 = vcmp.eq.s32.totalorder %v214, 1
    %vm263 = vcmp.eq.s32.totalorder %v215, 1
    %vm264 = vcmp.eq.s32.totalorder %v216, 1
    %vm265 = vcmp.eq.s32.totalorder %v217, 1
    %vm266 = vcmp.eq.s32.totalorder %v218, 1
    %vm267 = vcmp.eq.s32.totalorder %v219, 1
    %vm268 = vcmp.eq.s32.totalorder %v220, 1
    %vm269 = vcmp.eq.s32.totalorder %v221, 1
    %v270 = vsel %vm222, %v26, 0.0
    %v271 = vsel %vm223, %v27, 0.0
    %v272 = vsel %vm224, %v28, 0.0
    %v273 = vsel %vm225, %v29, 0.0
    %v274 = vsel %vm226, %v30, 0.0
    %v275 = vsel %vm227, %v31, 0.0
    %v276 = vsel %vm228, %v32, 0.0
    %v277 = vsel %vm229, %v33, 0.0
    %v278 = vsel %vm230, %v34, 0.0
    %v279 = vsel %vm231, %v35, 0.0
    %v280 = vsel %vm232, %v36, 0.0
    %v281 = vsel %vm233, %v37, 0.0
    %v282 = vsel %vm234, %v38, 0.0
    %v283 = vsel %vm235, %v39, 0.0
    %v284 = vsel %vm236, %v40, 0.0
    %v285 = vsel %vm237, %v41, 0.0
    %v286 = vsel %vm238, %v42, 0.0
    %v287 = vsel %vm239, %v43, 0.0
    %v288 = vsel %vm240, %v44, 0.0
    %v289 = vsel %vm241, %v45, 0.0
    %v290 = vsel %vm242, %v46, 0.0
    %v291 = vsel %vm243, %v47, 0.0
    %v292 = vsel %vm244, %v48, 0.0
    %v293 = vsel %vm245, %v49, 0.0
    %v294 = vsel %vm246, %v50, 0.0
    %v295 = vsel %vm247, %v51, 0.0
    %v296 = vsel %vm248, %v52, 0.0
    %v297 = vsel %vm249, %v53, 0.0
    %v298 = vsel %vm250, %v54, 0.0
    %v299 = vsel %vm251, %v55, 0.0
    %v300 = vsel %vm252, %v56, 0.0
    %v301 = vsel %vm253, %v57, 0.0
    %v302 = vsel %vm254, %v58, 0.0
    %v303 = vsel %vm255, %v59, 0.0
    %v304 = vsel %vm256, %v60, 0.0
    %v305 = vsel %vm257, %v61, 0.0
    %v306 = vsel %vm258, %v62, 0.0
    %v307 = vsel %vm259, %v63, 0.0
    %v308 = vsel %vm260, %v64, 0.0
    %v309 = vsel %vm261, %v65, 0.0
    %v310 = vsel %vm262, %v66, 0.0
    %v311 = vsel %vm263, %v67, 0.0
    %v312 = vsel %vm264, %v68, 0.0
    %v313 = vsel %vm265, %v69, 0.0
    %v314 = vsel %vm266, %v70, 0.0
    %v315 = vsel %vm267, %v71, 0.0
    %v316 = vsel %vm268, %v72, 0.0
    %v317 = vsel %vm269, %v73, 0.0
    %v318 = vld [vmem:[%s1] sm:$0xff]
    %v319 = vld [vmem:[%s1 + $0x8] sm:$0xff]
    %vm320 = vcmask 261120
    %v322 = vsel %vm320, %v318, 0
    %v325 = vsel %vm320, %v319, 0
    %v328 = vsel %vm320, %v270, 0
    %v331 = vsel %vm320, %v271, 0
    %v334 = vsel %vm320, %v272, 0
    %v337 = vsel %vm320, %v273, 0
    %v340 = vsel %vm320, %v274, 0
    %v343 = vsel %vm320, %v275, 0
    %v346 = vsel %vm320, %v276, 0
    %v349 = vsel %vm320, %v277, 0
    %v352 = vsel %vm320, %v278, 0
    %v355 = vsel %vm320, %v279, 0
    %v358 = vsel %vm320, %v280, 0
    %v361 = vsel %vm320, %v281, 0
    %v364 = vsel %vm320, %v282, 0
    %v367 = vsel %vm320, %v283, 0
    %v370 = vsel %vm320, %v284, 0
    %v373 = vsel %vm320, %v285, 0
    %v376 = vsel %vm320, %v286, 0
    %v379 = vsel %vm320, %v287, 0
    %v382 = vsel %vm320, %v288, 0
    %v385 = vsel %vm320, %v289, 0
    %v388 = vsel %vm320, %v290, 0
    %v391 = vsel %vm320, %v291, 0
    %v394 = vsel %vm320, %v292, 0
    %v397 = vsel %vm320, %v293, 0
    %v400 = vsel %vm320, %v294, 0
    %v403 = vsel %vm320, %v295, 0
    %v406 = vsel %vm320, %v296, 0
    %v409 = vsel %vm320, %v297, 0
    %v412 = vsel %vm320, %v298, 0
    %v415 = vsel %vm320, %v299, 0
    %v418 = vsel %vm320, %v300, 0
    %v421 = vsel %vm320, %v301, 0
    %v424 = vsel %vm320, %v302, 0
    %v427 = vsel %vm320, %v303, 0
    %v430 = vsel %vm320, %v304, 0
    %v433 = vsel %vm320, %v305, 0
    %v436 = vsel %vm320, %v306, 0
    %v439 = vsel %vm320, %v307, 0
    %v442 = vsel %vm320, %v308, 0
    %v445 = vsel %vm320, %v309, 0
    %v448 = vsel %vm320, %v310, 0
    %v451 = vsel %vm320, %v311, 0
    %v454 = vsel %vm320, %v312, 0
    %v457 = vsel %vm320, %v313, 0
    %v460 = vsel %vm320, %v314, 0
    %v463 = vsel %vm320, %v315, 0
    %v466 = vsel %vm320, %v316, 0
    %v469 = vsel %vm320, %v317, 0
    %471 = vmatprep.subr.mxu0 0.0
    %472 = vmatpush1.xpose.msra.mxu0 %v373
    %473 = vmatprep.subr.mxu0 0.0
    %474 = vmatpush1.xpose.msra.mxu0 %v370
    %475 = vmatprep.subr.mxu0 0.0
    %476 = vmatpush1.xpose.msra.mxu0 %v367
    %477 = vmatprep.subr.mxu0 0.0
    %478 = vmatpush1.xpose.msra.mxu0 %v364
    %479 = vmatprep.subr.mxu0 0.0
    %480 = vmatpush1.xpose.msra.mxu0 %v361
    %481 = vmatprep.subr.mxu0 0.0
    %482 = vmatpush1.xpose.msra.mxu0 %v358
    %483 = vmatprep.subr.mxu0 0.0
    %484 = vmatpush1.xpose.msra.mxu0 %v355
    %485 = vmatprep.subr.mxu0 0.0
    %486 = vmatpush1.xpose.msra.mxu0 %v352
    %487 = vmatprep.subr.mxu0 0.0
    %488 = vmatpush1.xpose.msra.mxu0 %v349
    %489 = vmatprep.subr.mxu0 0.0
    %490 = vmatpush1.xpose.msra.mxu0 %v346
    %491 = vmatprep.subr.mxu0 0.0
    %492 = vmatpush1.xpose.msra.mxu0 %v343
    %493 = vmatprep.subr.mxu0 0.0
    %494 = vmatpush1.xpose.msra.mxu0 %v340
    %495 = vmatprep.subr.mxu0 0.0
    %496 = vmatpush1.xpose.msra.mxu0 %v337
    %497 = vmatprep.subr.mxu0 0.0
    %498 = vmatpush1.xpose.msra.mxu0 %v334
    %499 = vmatprep.subr.mxu0 0.0
    %500 = vmatpush1.xpose.msra.mxu0 %v331
    %501 = vmatprep.subr.mxu0 0.0
    %502 = vmatpush1.xpose.msra.mxu0 %v328
    %503 = vmatprep.subr.mxu0 0.0
    %504 = vmatpush2.xpose.msra.mxu0 %v421
    %505 = vmatprep.subr.mxu0 0.0
    %506 = vmatpush2.xpose.msra.mxu0 %v418
    %507 = vmatprep.subr.mxu0 0.0
    %508 = vmatpush2.xpose.msra.mxu0 %v415
    %509 = vmatprep.subr.mxu0 0.0
    %510 = vmatpush2.xpose.msra.mxu0 %v412
    %511 = vmatprep.subr.mxu0 0.0
    %512 = vmatpush2.xpose.msra.mxu0 %v409
    %513 = vmatprep.subr.mxu0 0.0
    %514 = vmatpush2.xpose.msra.mxu0 %v406
    %515 = vmatprep.subr.mxu0 0.0
    %516 = vmatpush2.xpose.msra.mxu0 %v403
    %517 = vmatprep.subr.mxu0 0.0
    %518 = vmatpush2.xpose.msra.mxu0 %v400
    %519 = vmatprep.subr.mxu0 0.0
    %520 = vmatpush2.xpose.msra.mxu0 %v397
    %521 = vmatprep.subr.mxu0 0.0
    %522 = vmatpush2.xpose.msra.mxu0 %v394
    %523 = vmatprep.subr.mxu0 0.0
    %524 = vmatpush2.xpose.msra.mxu0 %v391
    %525 = vmatprep.subr.mxu0 0.0
    %526 = vmatpush2.xpose.msra.mxu0 %v388
    %527 = vmatprep.subr.mxu0 0.0
    %528 = vmatpush2.xpose.msra.mxu0 %v385
    %529 = vmatprep.subr.mxu0 0.0
    %530 = vmatpush2.xpose.msra.mxu0 %v382
    %531 = vmatprep.subr.mxu0 0.0
    %532 = vmatpush2.xpose.msra.mxu0 %v379
    %533 = vmatprep.subr.mxu0 0.0
    %534 = vmatpush2.xpose.msra.mxu0 %v376
    %535 = vmatprep.mubr.f32.mxu0 0.0
    %536 = vmatmul.mubr.f32.gmra.mxu0 %v322
    %v537 = vpop.f32.mrf.mxu0
    %v538 = vadd.f32 0.0, %v537
    %v539 = vpop.f32.mrf.mxu0
    %v540 = vadd.f32 0.0, %v539
    %541 = vmatprep.mubr.f32.mxu0 0.0
    %542 = vmatmul.mubr.f32.gmra.mxu0 %v325
    %v543 = vpop.f32.mrf.mxu0
    %v544 = vadd.f32 0.0, %v543
    %v545 = vpop.f32.mrf.mxu0
    %v546 = vadd.f32 0.0, %v545
    %547 = vdwg.mxu0
    %548 = vmatprep.subr.mxu0 0.0
    %549 = vmatpush1.xpose.msra.mxu0 %v469
    %550 = vmatprep.subr.mxu0 0.0
    %551 = vmatpush1.xpose.msra.mxu0 %v466
    %552 = vmatprep.subr.mxu0 0.0
    %553 = vmatpush1.xpose.msra.mxu0 %v463
    %554 = vmatprep.subr.mxu0 0.0
    %555 = vmatpush1.xpose.msra.mxu0 %v460
    %556 = vmatprep.subr.mxu0 0.0
    %557 = vmatpush1.xpose.msra.mxu0 %v457
    %558 = vmatprep.subr.mxu0 0.0
    %559 = vmatpush1.xpose.msra.mxu0 %v454
    %560 = vmatprep.subr.mxu0 0.0
    %561 = vmatpush1.xpose.msra.mxu0 %v451
    %562 = vmatprep.subr.mxu0 0.0
    %563 = vmatpush1.xpose.msra.mxu0 %v448
    %564 = vmatprep.subr.mxu0 0.0
    %565 = vmatpush1.xpose.msra.mxu0 %v445
    %566 = vmatprep.subr.mxu0 0.0
    %567 = vmatpush1.xpose.msra.mxu0 %v442
    %568 = vmatprep.subr.mxu0 0.0
    %569 = vmatpush1.xpose.msra.mxu0 %v439
    %570 = vmatprep.subr.mxu0 0.0
    %571 = vmatpush1.xpose.msra.mxu0 %v436
    %572 = vmatprep.subr.mxu0 0.0
    %573 = vmatpush1.xpose.msra.mxu0 %v433
    %574 = vmatprep.subr.mxu0 0.0
    %575 = vmatpush1.xpose.msra.mxu0 %v430
    %576 = vmatprep.subr.mxu0 0.0
    %577 = vmatpush1.xpose.msra.mxu0 %v427
    %578 = vmatprep.subr.mxu0 0.0
    %579 = vmatpush1.xpose.msra.mxu0 %v424
    %580 = vmatprep.subr.mxu0 0.0
    %581 = vmatpush2.xpose.msra.mxu0 0.0
    %582 = vmatprep.subr.mxu0 0.0
    %583 = vmatpush2.xpose.msra.mxu0 0.0
    %584 = vmatprep.subr.mxu0 0.0
    %585 = vmatpush2.xpose.msra.mxu0 0.0
    %586 = vmatprep.subr.mxu0 0.0
    %587 = vmatpush2.xpose.msra.mxu0 0.0
    %588 = vmatprep.subr.mxu0 0.0
    %589 = vmatpush2.xpose.msra.mxu0 0.0
    %590 = vmatprep.subr.mxu0 0.0
    %591 = vmatpush2.xpose.msra.mxu0 0.0
    %592 = vmatprep.subr.mxu0 0.0
    %593 = vmatpush2.xpose.msra.mxu0 0.0
    %594 = vmatprep.subr.mxu0 0.0
    %595 = vmatpush2.xpose.msra.mxu0 0.0
    %596 = vmatprep.subr.mxu0 0.0
    %597 = vmatpush2.xpose.msra.mxu0 0.0
    %598 = vmatprep.subr.mxu0 0.0
    %599 = vmatpush2.xpose.msra.mxu0 0.0
    %600 = vmatprep.subr.mxu0 0.0
    %601 = vmatpush2.xpose.msra.mxu0 0.0
    %602 = vmatprep.subr.mxu0 0.0
    %603 = vmatpush2.xpose.msra.mxu0 0.0
    %604 = vmatprep.subr.mxu0 0.0
    %605 = vmatpush2.xpose.msra.mxu0 0.0
    %606 = vmatprep.subr.mxu0 0.0
    %607 = vmatpush2.xpose.msra.mxu0 0.0
    %608 = vmatprep.subr.mxu0 0.0
    %609 = vmatpush2.xpose.msra.mxu0 0.0
    %610 = vmatprep.subr.mxu0 0.0
    %611 = vmatpush2.xpose.msra.mxu0 0.0
    %612 = vmatprep.mubr.f32.mxu0 0.0
    %613 = vmatmul.mubr.f32.gmra.mxu0 %v322
    %v614 = vpop.f32.mrf.mxu0
    %v615 = vadd.f32 0.0, %v614
    %v616 = vpop.f32.mrf.mxu0
    %617 = vmatprep.mubr.f32.mxu0 0.0
    %618 = vmatmul.mubr.f32.gmra.mxu0 %v325
    %v619 = vpop.f32.mrf.mxu0
    %v620 = vadd.f32 0.0, %v619
    %v621 = vpop.f32.mrf.mxu0
    %622 = vdwg.mxu0
    %v623 = vsub.f32 0.0, %v538
    %v624 = vsub.f32 0.0, %v540
    %v625 = vsub.f32 0.0, %v615
    %v626 = vsub.f32 0.0, %v544
    %v627 = vsub.f32 0.0, %v546
    %v628 = vsub.f32 0.0, %v620
    %v629 = vmul.f32 %v623, 1.442695
    %v630 = vpow.pop %v629
    %v631 = vmul.f32 %v624, 1.442695
    %v632 = vpow.pop %v631
    %v633 = vmul.f32 %v625, 1.442695
    %v634 = vpow.pop %v633
    %v635 = vmul.f32 %v626, 1.442695
    %v636 = vpow.pop %v635
    %v637 = vmul.f32 %v627, 1.442695
    %v638 = vpow.pop %v637
    %v639 = vmul.f32 %v628, 1.442695
    %v640 = vpow.pop %v639
    %v641 = vadd.f32 %v630, 1.0
    %v642 = vadd.f32 %v632, 1.0
    %v643 = vadd.f32 %v634, 1.0
    %v644 = vadd.f32 %v636, 1.0
    %v645 = vadd.f32 %v638, 1.0
    %v646 = vadd.f32 %v640, 1.0
    %v647 = vrcp.pop %v641
    %v648 = vmul.f32 %v538, %v647
    %v649 = vrcp.pop %v642
    %v650 = vmul.f32 %v540, %v649
    %v651 = vrcp.pop %v643
    %v652 = vmul.f32 %v615, %v651
    %v653 = vrcp.pop %v644
    %v654 = vmul.f32 %v544, %v653
    %v655 = vrcp.pop %v645
    %v656 = vmul.f32 %v546, %v655
    %v657 = vrcp.pop %v646
    %v658 = vmul.f32 %v620, %v657
    %v659 = vld [vmem:[%s2] sm:$0xff]
    %v660 = vld [vmem:[%s2 + $0x8] sm:$0xff]
    %v661 = vld [vmem:[%s3] sm:$0xff]
    %v662 = vld [vmem:[%s3 + $0x8] sm:$0xff]
    %664 = vset.pattern.permute.xlu0 0
    %665 = vperm.xlu0 %664, %v661
    %v666 = vpop.permute.xlu0 %665
    %669 = vset.pattern.permute.xlu0 0
    %670 = vperm.xlu0 %669, %v662
    %v671 = vpop.permute.xlu0 %670
    %vm673 = vcmask 130048
    %v675 = vsel %vm673, %v659, 0
    %v678 = vsel %vm673, %v660, 0
    %680 = vmatprep.subr.mxu0 0.0
    %681 = vmatpush1.msra.mxu0 0.0
    %682 = vmatprep.subr.mxu0 0.0
    %683 = vmatpush1.msra.mxu0 0.0
    %684 = vmatprep.subr.mxu0 0.0
    %685 = vmatpush1.msra.mxu0 0.0
    %686 = vmatprep.subr.mxu0 0.0
    %687 = vmatpush1.msra.mxu0 0.0
    %688 = vmatprep.subr.mxu0 0.0
    %689 = vmatpush1.msra.mxu0 0.0
    %690 = vmatprep.subr.mxu0 0.0
    %691 = vmatpush1.msra.mxu0 0.0
    %692 = vmatprep.subr.mxu0 0.0
    %693 = vmatpush1.msra.mxu0 0.0
    %694 = vmatprep.subr.mxu0 0.0
    %695 = vmatpush1.msra.mxu0 0.0
    %696 = vmatprep.subr.mxu0 0.0
    %697 = vmatpush1.msra.mxu0 0.0
    %698 = vmatprep.subr.mxu0 0.0
    %699 = vmatpush1.msra.mxu0 0.0
    %700 = vmatprep.subr.mxu0 0.0
    %701 = vmatpush1.msra.mxu0 0.0
    %702 = vmatprep.subr.mxu0 0.0
    %703 = vmatpush1.msra.mxu0 0.0
    %704 = vmatprep.subr.mxu0 0.0
    %705 = vmatpush1.msra.mxu0 0.0
    %706 = vmatprep.subr.mxu0 0.0
    %707 = vmatpush1.msra.mxu0 0.0
    %708 = vmatprep.subr.mxu0 %v656
    %709 = vmatpush1.msra.mxu0 %v654
    %710 = vmatprep.subr.mxu0 %v650
    %711 = vmatpush1.msra.mxu0 %v648
    %712 = vmatprep.subr.mxu0 0.0
    %713 = vmatpush2.msra.mxu0 0.0
    %714 = vmatprep.subr.mxu0 0.0
    %715 = vmatpush2.msra.mxu0 0.0
    %716 = vmatprep.subr.mxu0 0.0
    %717 = vmatpush2.msra.mxu0 0.0
    %718 = vmatprep.subr.mxu0 0.0
    %719 = vmatpush2.msra.mxu0 0.0
    %720 = vmatprep.subr.mxu0 0.0
    %721 = vmatpush2.msra.mxu0 0.0
    %722 = vmatprep.subr.mxu0 0.0
    %723 = vmatpush2.msra.mxu0 0.0
    %724 = vmatprep.subr.mxu0 0.0
    %725 = vmatpush2.msra.mxu0 0.0
    %726 = vmatprep.subr.mxu0 0.0
    %727 = vmatpush2.msra.mxu0 0.0
    %728 = vmatprep.subr.mxu0 0.0
    %729 = vmatpush2.msra.mxu0 0.0
    %730 = vmatprep.subr.mxu0 0.0
    %731 = vmatpush2.msra.mxu0 0.0
    %732 = vmatprep.subr.mxu0 0.0
    %733 = vmatpush2.msra.mxu0 0.0
    %734 = vmatprep.subr.mxu0 0.0
    %735 = vmatpush2.msra.mxu0 0.0
    %736 = vmatprep.subr.mxu0 0.0
    %737 = vmatpush2.msra.mxu0 0.0
    %738 = vmatprep.subr.mxu0 0.0
    %739 = vmatpush2.msra.mxu0 0.0
    %740 = vmatprep.subr.mxu0 0.0
    %741 = vmatpush2.msra.mxu0 0.0
    %742 = vmatprep.subr.mxu0 0.0
    %743 = vmatpush2.msra.mxu0 0.0
    %744 = vmatprep.mubr.f32.mxu0 0.0
    %745 = vmatmul.mubr.f32.gmra.mxu0 %v675
    %v746 = vpop.f32.mrf.mxu0
    %v747 = vadd.f32 %v666, %v746
    %v748 = vpop.f32.mrf.mxu0
    %v749 = vadd.f32 %v666, %v748
    %750 = vmatprep.mubr.f32.mxu0 0.0
    %751 = vmatmul.mubr.f32.gmra.mxu0 %v678
    %v752 = vpop.f32.mrf.mxu0
    %v753 = vadd.f32 %v671, %v752
    %v754 = vpop.f32.mrf.mxu0
    %v755 = vadd.f32 %v671, %v754
    %756 = vdwg.mxu0
    %757 = vmatprep.subr.mxu0 0.0
    %758 = vmatpush1.msra.mxu0 0.0
    %759 = vmatprep.subr.mxu0 0.0
    %760 = vmatpush1.msra.mxu0 0.0
    %761 = vmatprep.subr.mxu0 0.0
    %762 = vmatpush1.msra.mxu0 0.0
    %763 = vmatprep.subr.mxu0 0.0
    %764 = vmatpush1.msra.mxu0 0.0
    %765 = vmatprep.subr.mxu0 0.0
    %766 = vmatpush1.msra.mxu0 0.0
    %767 = vmatprep.subr.mxu0 0.0
    %768 = vmatpush1.msra.mxu0 0.0
    %769 = vmatprep.subr.mxu0 0.0
    %770 = vmatpush1.msra.mxu0 0.0
    %771 = vmatprep.subr.mxu0 0.0
    %772 = vmatpush1.msra.mxu0 0.0
    %773 = vmatprep.subr.mxu0 0.0
    %774 = vmatpush1.msra.mxu0 0.0
    %775 = vmatprep.subr.mxu0 0.0
    %776 = vmatpush1.msra.mxu0 0.0
    %777 = vmatprep.subr.mxu0 0.0
    %778 = vmatpush1.msra.mxu0 0.0
    %779 = vmatprep.subr.mxu0 0.0
    %780 = vmatpush1.msra.mxu0 0.0
    %781 = vmatprep.subr.mxu0 0.0
    %782 = vmatpush1.msra.mxu0 0.0
    %783 = vmatprep.subr.mxu0 0.0
    %784 = vmatpush1.msra.mxu0 0.0
    %785 = vmatprep.subr.mxu0 0.0
    %786 = vmatpush1.msra.mxu0 %v658
    %787 = vmatprep.subr.mxu0 0.0
    %788 = vmatpush1.msra.mxu0 %v652
    %789 = vmatprep.subr.mxu0 0.0
    %790 = vmatpush2.msra.mxu0 0.0
    %791 = vmatprep.subr.mxu0 0.0
    %792 = vmatpush2.msra.mxu0 0.0
    %793 = vmatprep.subr.mxu0 0.0
    %794 = vmatpush2.msra.mxu0 0.0
    %795 = vmatprep.subr.mxu0 0.0
    %796 = vmatpush2.msra.mxu0 0.0
    %797 = vmatprep.subr.mxu0 0.0
    %798 = vmatpush2.msra.mxu0 0.0
    %799 = vmatprep.subr.mxu0 0.0
    %800 = vmatpush2.msra.mxu0 0.0
    %801 = vmatprep.subr.mxu0 0.0
    %802 = vmatpush2.msra.mxu0 0.0
    %803 = vmatprep.subr.mxu0 0.0
    %804 = vmatpush2.msra.mxu0 0.0
    %805 = vmatprep.subr.mxu0 0.0
    %806 = vmatpush2.msra.mxu0 0.0
    %807 = vmatprep.subr.mxu0 0.0
    %808 = vmatpush2.msra.mxu0 0.0
    %809 = vmatprep.subr.mxu0 0.0
    %810 = vmatpush2.msra.mxu0 0.0
    %811 = vmatprep.subr.mxu0 0.0
    %812 = vmatpush2.msra.mxu0 0.0
    %813 = vmatprep.subr.mxu0 0.0
    %814 = vmatpush2.msra.mxu0 0.0
    %815 = vmatprep.subr.mxu0 0.0
    %816 = vmatpush2.msra.mxu0 0.0
    %817 = vmatprep.subr.mxu0 0.0
    %818 = vmatpush2.msra.mxu0 0.0
    %819 = vmatprep.subr.mxu0 0.0
    %820 = vmatpush2.msra.mxu0 0.0
    %821 = vmatprep.mubr.f32.mxu0 0.0
    %822 = vmatmul.mubr.f32.gmra.mxu0 %v675
    %v823 = vpop.f32.mrf.mxu0
    %v824 = vadd.f32 %v666, %v823
    %v825 = vpop.f32.mrf.mxu0
    %826 = vmatprep.mubr.f32.mxu0 0.0
    %827 = vmatmul.mubr.f32.gmra.mxu0 %v678
    %v828 = vpop.f32.mrf.mxu0
    %v829 = vadd.f32 %v671, %v828
    %v830 = vpop.f32.mrf.mxu0
    %831 = vdwg.mxu0
    %v832 = vsub.f32 0.0, %v747
    %v833 = vsub.f32 0.0, %v749
    %v834 = vsub.f32 0.0, %v824
    %v835 = vsub.f32 0.0, %v753
    %v836 = vsub.f32 0.0, %v755
    %v837 = vsub.f32 0.0, %v829
    %v838 = vmul.f32 %v832, 1.442695
    %v839 = vpow.pop %v838
    %v840 = vmul.f32 %v833, 1.442695
    %v841 = vpow.pop %v840
    %v842 = vmul.f32 %v834, 1.442695
    %v843 = vpow.pop %v842
    %v844 = vmul.f32 %v835, 1.442695
    %v845 = vpow.pop %v844
    %v846 = vmul.f32 %v836, 1.442695
    %v847 = vpow.pop %v846
    %v848 = vmul.f32 %v837, 1.442695
    %v849 = vpow.pop %v848
    %v850 = vadd.f32 %v839, 1.0
    %v851 = vadd.f32 %v841, 1.0
    %v852 = vadd.f32 %v843, 1.0
    %v853 = vadd.f32 %v845, 1.0
    %v854 = vadd.f32 %v847, 1.0
    %v855 = vadd.f32 %v849, 1.0
    %v856 = vrcp.pop %v850
    %v857 = vmul.f32 %v747, %v856
    %v858 = vrcp.pop %v851
    %v859 = vmul.f32 %v749, %v858
    %v860 = vrcp.pop %v852
    %v861 = vmul.f32 %v824, %v860
    %v862 = vrcp.pop %v853
    %v863 = vmul.f32 %v753, %v862
    %v864 = vrcp.pop %v854
    %v865 = vmul.f32 %v755, %v864
    %v866 = vrcp.pop %v855
    %v867 = vmul.f32 %v829, %v866
    %v868 = vld [vmem:[%s4] sm:$0x1]
    %v869 = vld [vmem:[#allocation2] sm:$0x1]
    %871 = vset.pattern.permute.xlu0 0
    %872 = vperm.xlu0 %871, %v869
    %v873 = vpop.permute.xlu0 %872
    %v875 = vlaneseq
    %v876 = vshrl.u32 %v875, 7
    %v877 = vsub.s32 0, %v876
    %v878 = vrot.slane %v873, %v877
    %v880 = vsel %vm673, %v868, 0
    %882 = vmatprep.subr.mxu0 0.0
    %883 = vmatpush1.msra.mxu0 0.0
    %884 = vmatprep.subr.mxu0 0.0
    %885 = vmatpush1.msra.mxu0 0.0
    %886 = vmatprep.subr.mxu0 0.0
    %887 = vmatpush1.msra.mxu0 0.0
    %888 = vmatprep.subr.mxu0 0.0
    %889 = vmatpush1.msra.mxu0 0.0
    %890 = vmatprep.subr.mxu0 0.0
    %891 = vmatpush1.msra.mxu0 0.0
    %892 = vmatprep.subr.mxu0 0.0
    %893 = vmatpush1.msra.mxu0 0.0
    %894 = vmatprep.subr.mxu0 0.0
    %895 = vmatpush1.msra.mxu0 0.0
    %896 = vmatprep.subr.mxu0 0.0
    %897 = vmatpush1.msra.mxu0 0.0
    %898 = vmatprep.subr.mxu0 0.0
    %899 = vmatpush1.msra.mxu0 0.0
    %900 = vmatprep.subr.mxu0 0.0
    %901 = vmatpush1.msra.mxu0 0.0
    %902 = vmatprep.subr.mxu0 0.0
    %903 = vmatpush1.msra.mxu0 0.0
    %904 = vmatprep.subr.mxu0 0.0
    %905 = vmatpush1.msra.mxu0 0.0
    %906 = vmatprep.subr.mxu0 0.0
    %907 = vmatpush1.msra.mxu0 0.0
    %908 = vmatprep.subr.mxu0 0.0
    %909 = vmatpush1.msra.mxu0 0.0
    %910 = vmatprep.subr.mxu0 %v865
    %911 = vmatpush1.msra.mxu0 %v863
    %912 = vmatprep.subr.mxu0 %v859
    %913 = vmatpush1.msra.mxu0 %v857
    %914 = vmatprep.subr.mxu0 0.0
    %915 = vmatpush2.msra.mxu0 0.0
    %916 = vmatprep.subr.mxu0 0.0
    %917 = vmatpush2.msra.mxu0 0.0
    %918 = vmatprep.subr.mxu0 0.0
    %919 = vmatpush2.msra.mxu0 0.0
    %920 = vmatprep.subr.mxu0 0.0
    %921 = vmatpush2.msra.mxu0 0.0
    %922 = vmatprep.subr.mxu0 0.0
    %923 = vmatpush2.msra.mxu0 0.0
    %924 = vmatprep.subr.mxu0 0.0
    %925 = vmatpush2.msra.mxu0 0.0
    %926 = vmatprep.subr.mxu0 0.0
    %927 = vmatpush2.msra.mxu0 0.0
    %928 = vmatprep.subr.mxu0 0.0
    %929 = vmatpush2.msra.mxu0 0.0
    %930 = vmatprep.subr.mxu0 0.0
    %931 = vmatpush2.msra.mxu0 0.0
    %932 = vmatprep.subr.mxu0 0.0
    %933 = vmatpush2.msra.mxu0 0.0
    %934 = vmatprep.subr.mxu0 0.0
    %935 = vmatpush2.msra.mxu0 0.0
    %936 = vmatprep.subr.mxu0 0.0
    %937 = vmatpush2.msra.mxu0 0.0
    %938 = vmatprep.subr.mxu0 0.0
    %939 = vmatpush2.msra.mxu0 0.0
    %940 = vmatprep.subr.mxu0 0.0
    %941 = vmatpush2.msra.mxu0 0.0
    %942 = vmatprep.subr.mxu0 0.0
    %943 = vmatpush2.msra.mxu0 0.0
    %944 = vmatprep.subr.mxu0 0.0
    %945 = vmatpush2.msra.mxu0 0.0
    %946 = vmatprep.mubr.f32.mxu0 0.0
    %947 = vmatmul.mubr.f32.gmra.mxu0 %v880
    %v948 = vpop.f32.mrf.mxu0
    %v949 = vadd.f32 %v878, %v948
    %v950 = vpop.f32.mrf.mxu0
    %v951 = vadd.f32 %v878, %v950
    %952 = vdwg.mxu0
    %953 = vmatprep.subr.mxu0 0.0
    %954 = vmatpush1.msra.mxu0 0.0
    %955 = vmatprep.subr.mxu0 0.0
    %956 = vmatpush1.msra.mxu0 0.0
    %957 = vmatprep.subr.mxu0 0.0
    %958 = vmatpush1.msra.mxu0 0.0
    %959 = vmatprep.subr.mxu0 0.0
    %960 = vmatpush1.msra.mxu0 0.0
    %961 = vmatprep.subr.mxu0 0.0
    %962 = vmatpush1.msra.mxu0 0.0
    %963 = vmatprep.subr.mxu0 0.0
    %964 = vmatpush1.msra.mxu0 0.0
    %965 = vmatprep.subr.mxu0 0.0
    %966 = vmatpush1.msra.mxu0 0.0
    %967 = vmatprep.subr.mxu0 0.0
    %968 = vmatpush1.msra.mxu0 0.0
    %969 = vmatprep.subr.mxu0 0.0
    %970 = vmatpush1.msra.mxu0 0.0
    %971 = vmatprep.subr.mxu0 0.0
    %972 = vmatpush1.msra.mxu0 0.0
    %973 = vmatprep.subr.mxu0 0.0
    %974 = vmatpush1.msra.mxu0 0.0
    %975 = vmatprep.subr.mxu0 0.0
    %976 = vmatpush1.msra.mxu0 0.0
    %977 = vmatprep.subr.mxu0 0.0
    %978 = vmatpush1.msra.mxu0 0.0
    %979 = vmatprep.subr.mxu0 0.0
    %980 = vmatpush1.msra.mxu0 0.0
    %981 = vmatprep.subr.mxu0 0.0
    %982 = vmatpush1.msra.mxu0 %v867
    %983 = vmatprep.subr.mxu0 0.0
    %984 = vmatpush1.msra.mxu0 %v861
    %985 = vmatprep.subr.mxu0 0.0
    %986 = vmatpush2.msra.mxu0 0.0
    %987 = vmatprep.subr.mxu0 0.0
    %988 = vmatpush2.msra.mxu0 0.0
    %989 = vmatprep.subr.mxu0 0.0
    %990 = vmatpush2.msra.mxu0 0.0
    %991 = vmatprep.subr.mxu0 0.0
    %992 = vmatpush2.msra.mxu0 0.0
    %993 = vmatprep.subr.mxu0 0.0
    %994 = vmatpush2.msra.mxu0 0.0
    %995 = vmatprep.subr.mxu0 0.0
    %996 = vmatpush2.msra.mxu0 0.0
    %997 = vmatprep.subr.mxu0 0.0
    %998 = vmatpush2.msra.mxu0 0.0
    %999 = vmatprep.subr.mxu0 0.0
    %1000 = vmatpush2.msra.mxu0 0.0
    %1001 = vmatprep.subr.mxu0 0.0
    %1002 = vmatpush2.msra.mxu0 0.0
    %1003 = vmatprep.subr.mxu0 0.0
    %1004 = vmatpush2.msra.mxu0 0.0
    %1005 = vmatprep.subr.mxu0 0.0
    %1006 = vmatpush2.msra.mxu0 0.0
    %1007 = vmatprep.subr.mxu0 0.0
    %1008 = vmatpush2.msra.mxu0 0.0
    %1009 = vmatprep.subr.mxu0 0.0
    %1010 = vmatpush2.msra.mxu0 0.0
    %1011 = vmatprep.subr.mxu0 0.0
    %1012 = vmatpush2.msra.mxu0 0.0
    %1013 = vmatprep.subr.mxu0 0.0
    %1014 = vmatpush2.msra.mxu0 0.0
    %1015 = vmatprep.subr.mxu0 0.0
    %1016 = vmatpush2.msra.mxu0 0.0
    %1017 = vmatprep.mubr.f32.mxu0 0.0
    %1018 = vmatmul.mubr.f32.gmra.mxu0 %v880
    %v1019 = vpop.f32.mrf.mxu0
    %v1020 = vadd.f32 %v878, %v1019
    %v1021 = vpop.f32.mrf.mxu0
    %1022 = vdwg.mxu0
    %v1026 = vcombine.low %v949, %v951
    %v1028 = vunpack.c.l.s4 1966171168
    %v1029 = vunpack.c.0.s8 %v1028
    %v1030 = vlaneseq
    %v1031 = vshrl.u32 %v1030, 7
    %v1032 = vsub.s32 %v1029, %v1031
    %v1033 = vrot.slane %v1026, %v1032
    %v1035 = vunpack.c.l.s4 1966171168
    %v1036 = vunpack.c.0.s8 %v1035
    %v1037 = vlaneseq
    %v1038 = vshrl.u32 %v1037, 7
    %v1039 = vsub.s32 %v1036, %v1038
    %v1040 = vrot.slane %v1020, %v1039
    %v1041 = vcombine.low %v1033, %v1040
    %v1043 = vunpack.c.l.s4 1966171168
    %v1044 = vunpack.c.0.s8 %v1043
    %v1045 = vlaneseq
    %v1046 = vshrl.u32 %v1045, 7
    %v1047 = vsub.s32 %v1044, %v1046
    %v1048 = vrot.slane %v1041, %v1047
    %v1050 = vlaneseq
    %vm1051 = vcmp.ge.s32.totalorder %v1050, 0
    %vm1052 = vcmp.lt.s32.totalorder %v1050, 384
    %vm1053 = vmand %vm1051, %vm1052
    %1054 = vst.msk [vmem:[#allocation3] sm:$0x7] %vm1053, %v1048
    // Predicated region
    $region26: #{tpu_custom_call.1} parent=1 // pred_check
      _
    $region27: #{tpu_custom_call.1} parent=1 // pred_check_branch
      %1056 = sbr.rel (0) target = $region29
    $region28: #{tpu_custom_call.1} parent=1 // pred_region
      %s1058 = ssub.s32 48, 48
      %1059 = vsyncadd [#allocation4], %s1058
      %s1061 = sshll.u32 [#allocation3], 4
      %s1062 = int_to_ptr.vmem [resolvable:$true] %s1061
      %1064 = dma.vmem_to_hbm [thread:$0]  %s1062, 48, %s6, [#allocation4]
    $region29: #{tpu_custom_call.1} parent=1 // pred_fallthru
      _
    // Predicated region
    $region30: #{tpu_custom_call.1} parent=1 // pred_check
      _
    $region31: #{tpu_custom_call.1} parent=1 // pred_check_branch
      %1066 = sbr.rel (0) target = $region33
    $region32: #{tpu_custom_call.1} parent=1 // pred_region
      %1067 = dma.done [#allocation4], 48
    $region33: #{tpu_custom_call.1} parent=1 // pred_fallthru
      _
    %1068 = vsyncpa [#allocation4], 1

</llo_original>
